<compile_context>
chip_gen: v7x
topology: tpu7x:2x2x1
jax: 0.10.0
libtpu: 0.0.40
codegen_flags: <defaults>
</compile_context>

<pallas_src>
import functools
import math

import jax
import jax.numpy as jnp
from jax import lax
from jax.experimental import pallas as pl
from jax.experimental.pallas import tpu as pltpu

_LOG2E = 1.4426950408889634


# ----------------------------- Pallas kernel -------------------------------
def _attn_fwd_kernel(q_ref, k_ref, v_ref, o_ref, m_sc, l_sc, acc_sc,
                     *, scale, kv_len, tkv, mask_kv):
    """One (batch*head, q-tile, kv-tile) grid step of channel-major flash attention.

    q_ref : (1, C, tq)   channel-major Q tile (read straight out of fused qkv)
    k_ref : (1, C, tkv)  channel-major K tile (read straight out of fused qkv)
    v_ref : (1, C, tkv)  channel-major V tile (read straight out of fused qkv)
    o_ref : (1, C, tq)   channel-major output tile (lane dim = sequence)
    m_sc, l_sc : (1, tq) f32 running max / denominator (base-2 bookkeeping)
    acc_sc     : (C, tq) f32 output accumulator
    """
    ki = pl.program_id(2)

    @pl.when(ki == 0)
    def _():
        m_sc[...] = jnp.full(m_sc.shape, -jnp.inf, m_sc.dtype)
        l_sc[...] = jnp.zeros(l_sc.shape, l_sc.dtype)
        acc_sc[...] = jnp.zeros(acc_sc.shape, acc_sc.dtype)

    # scale = ch^-0.5 * log2(e): the full softmax scale plus the exp2 fold,
    # applied once to the small (C, tq) Q tile instead of every (tkv, tq) logit.
    q = q_ref[0] * scale             # (C, tq)
    k = k_ref[0]                     # (C, tkv)
    v = v_ref[0]                     # (C, tkv)

    # s[kv, t] = sum_c k[c, kv] * q[c, t]: contraction on the C axes, so no
    # wrapper-side (HBM) transpose of K is ever needed.
    s = lax.dot_general(k, q, (((0,), (0,)), ((), ())),
                        preferred_element_type=jnp.float32)      # (tkv, tq) f32

    if mask_kv:
        kv_ids = ki * tkv + lax.broadcasted_iota(jnp.int32, s.shape, 0)
        s = jnp.where(kv_ids < kv_len, s, -jnp.inf)

    m_prev = m_sc[...]                                            # (1, tq)
    m_new = jnp.maximum(m_prev, jnp.max(s, axis=0, keepdims=True))
    alpha = jnp.exp2(m_prev - m_new)                              # (1, tq)
    p = jnp.exp2(s - m_new)                                       # (tkv, tq) f32

    l_sc[...] = alpha * l_sc[...] + jnp.sum(p, axis=0, keepdims=True)
    # acc[c, t] += sum_s v[c, s] * p[s, t]; probabilities cast back to the input
    # dtype, matching torch's softmax(w.float()).type(w.dtype).
    acc_sc[...] = alpha * acc_sc[...] + jnp.dot(
        v, p.astype(v.dtype), preferred_element_type=jnp.float32)
    m_sc[...] = m_new

    @pl.when(ki == pl.num_programs(2) - 1)
    def _():
        inv_l = pl.reciprocal(l_sc[...], approx=True)
        o_ref[0] = (acc_sc[...] * inv_l).astype(o_ref.dtype)


# ------------------------------ wrapper -------------------------------------
def _q_map(cblk):
    def m(b, qi, ki):
        return (b, cblk, qi)
    return m


def _kv_map(cblk):
    def m(b, qi, ki):
        return (b, cblk, ki)
    return m


def _o_map(b, qi, ki):
    return (b, 0, qi)


_SINGLE_PASS_CAP = 1024     # max padded T for single-KV-pass mode (kv grid axis = 1)


def _select_tiles(T):
    """Return (Tp, tq, tkv): padded sequence length and query / key-value tiles."""
    if T < 128:
        return T, T, T                       # one full tile; no padding needed

    Tp = ((T + 127) // 128) * 128            # pad awkward T to a lane multiple

    def _pick(n, cap):
        for cand in (512, 256, 128):
            if cand <= cap and n % cand == 0:
                return cand
        return 128

    tq = _pick(Tp, 512)
    tkv = Tp if Tp <= _SINGLE_PASS_CAP else _pick(Tp, 512)
    return Tp, tq, tkv


def qkv_attention_legacy(qkv, n_heads):
    """Pallas equivalent of QKVAttentionLegacy.forward.

    qkv: [N, n_heads * 3 * C, T]  ->  [N, n_heads * C, T]
    """
    N, width, T = qkv.shape
    assert width % (3 * n_heads) == 0
    ch = width // (3 * n_heads)
    B = N * n_heads
    # ch^-0.25 on q and k == ch^-0.5 on q alone; fold log2(e) for the exp2 trick.
    scale = (1.0 / math.sqrt(ch)) * _LOG2E

    qkv3 = qkv.reshape(B, 3 * ch, T)         # free reshape (N, heads are adjacent)

    Tp, tq, tkv = _select_tiles(T)
    mask_kv = Tp != T
    if mask_kv:
        qkv3 = jnp.pad(qkv3, ((0, 0), (0, 0), (0, Tp - T)))

    grid = (B, Tp // tq, Tp // tkv)

    # Sublane packing of the input dtype: a channel block inside the fused qkv
    # buffer must start on a packed-tile boundary, else fall back to slicing.
    itemsize = jnp.dtype(qkv.dtype).itemsize
    pack = 8 * max(1, 4 // itemsize)         # 8 rows f32, 16 bf16, 32 int8/fp8
    if ch % pack == 0:
        q_in = k_in = v_in = qkv3
        cq, ck, cv = 0, 1, 2                 # channel-block index inside fused qkv
    else:
        # Rare (ch not a multiple of the packed sublane tile): slice once in HBM.
        q_in = qkv3[:, :ch, :]
        k_in = qkv3[:, ch:2 * ch, :]
        v_in = qkv3[:, 2 * ch:, :]
        cq = ck = cv = 0

    kernel = functools.partial(_attn_fwd_kernel, scale=scale, kv_len=T,
                               tkv=tkv, mask_kv=mask_kv)

    # Rough per-step VMEM footprint; raise the scoped limit only when big tiles
    # would not fit the conservative defaults (16 MiB v5e / 32 MiB v6e-v7x).
    est = (2 * (2 * ch * tq + 2 * ch * tkv) * itemsize       # dbl-buffered Q,O,K,V
           + (2 * tq + ch * tq) * 4                          # m, l, acc scratch
           + 6 * tkv * tq * 4                                # s/p/exp temporaries
           + (2 << 20))
    compiler_kwargs = dict(
        dimension_semantics=("parallel", "parallel", "arbitrary"))
    if est > 12 * 2 ** 20:
        compiler_kwargs["vmem_limit_bytes"] = int(min(56 * 2 ** 20, 2 * est))

    out = pl.pallas_call(
        kernel,
        out_shape=jax.ShapeDtypeStruct((B, ch, Tp), qkv.dtype),
        grid_spec=pltpu.PrefetchScalarGridSpec(
            num_scalar_prefetch=0,
            grid=grid,
            in_specs=[
                pl.BlockSpec((1, ch, tq), _q_map(cq)),      # Q (channel-major)
                pl.BlockSpec((1, ch, tkv), _kv_map(ck)),    # K (channel-major)
                pl.BlockSpec((1, ch, tkv), _kv_map(cv)),    # V (channel-major)
            ],
            out_specs=pl.BlockSpec((1, ch, tq), _o_map),
            scratch_shapes=[
                pltpu.VMEM((1, tq), jnp.float32),    # running max  m (base 2)
                pltpu.VMEM((1, tq), jnp.float32),    # running sum  l
                pltpu.VMEM((ch, tq), jnp.float32),   # f32 output accumulator
            ]),
        compiler_params=pltpu.CompilerParams(**compiler_kwargs),
    )(q_in, k_in, v_in)

    if mask_kv:
        out = out[:, :, :T]
    return out.reshape(N, n_heads * ch, T)


# ---------------------------- pure-JAX reference -----------------------------
def _reference(qkv, n_heads):
    N, width, T = qkv.shape
    ch = width // (3 * n_heads)
    x = qkv.reshape(N * n_heads, 3 * ch, T)
    q, k, v = x[:, :ch], x[:, ch:2 * ch], x[:, 2 * ch:]
    scale = 1.0 / math.sqrt(math.sqrt(ch))
    w = jnp.einsum('bct,bcs->bts', q * scale, k * scale,
                   precision=lax.Precision.HIGHEST)
    w = jax.nn.softmax(w.astype(jnp.float32), axis=-1).astype(w.dtype)
    a = jnp.einsum('bts,bcs->bct', w, v, precision=lax.Precision.HIGHEST)
    return a.reshape(N, n_heads * ch, T)


# --------------------------------- main --------------------------------------
if __name__ == "__main__":
    key = jax.random.PRNGKey(0)
    k0, k1, k2, k3 = jax.random.split(key, 4)
    attn = jax.jit(qkv_attention_legacy, static_argnums=1)

    def _check(qkv, n_heads, tol=2e-3):
        out = jax.block_until_ready(attn(qkv, n_heads))
        ref = _reference(qkv, n_heads)
        assert out.shape == ref.shape, (out.shape, ref.shape)
        err = float(jnp.max(jnp.abs(out - ref)))
        assert jnp.allclose(out, ref, atol=tol, rtol=tol), err

    # Small case: N=2, heads=2, ch=32, T=16 (single full-tile path, grid (4,1,1)).
    _check(jax.random.normal(k0, (2, 2 * 3 * 32, 16), jnp.float32), 2)
    # Single-KV-pass with several q tiles: heads=2, ch=64, T=384 (grid (4,3,1)).
    _check(jax.random.normal(k1, (2, 2 * 3 * 64, 384), jnp.float32), 2)
    # Awkward T exercising padding + key masking: heads=3, ch=16, T=200 -> Tp=256.
    _check(jax.random.normal(k2, (1, 3 * 3 * 16, 200), jnp.float32), 3)
    # Multi-KV-tile online-softmax path: heads=2, ch=32, T=1280 (grid (2,5,5)).
    _check(jax.random.normal(k3, (1, 2 * 3 * 32, 1280), jnp.float32), 2)

    print("KERNEL_OK")
</pallas_src>

<mosaic_0001>
module attributes {stable_mosaic.version = 11 : i64} {
  func.func @_attn_fwd_kernel(%arg0: i32, %arg1: i32, %arg2: i32, %arg3: memref<1x32x16xf32, #tpu.memory_space<vmem>>, %arg4: memref<1x32x16xf32, #tpu.memory_space<vmem>>, %arg5: memref<1x32x16xf32, #tpu.memory_space<vmem>>, %arg6: memref<1x32x16xf32, #tpu.memory_space<vmem>>, %arg7: memref<1x16xf32, #tpu.memory_space<vmem>>, %arg8: memref<1x16xf32, #tpu.memory_space<vmem>>, %arg9: memref<32x16xf32, #tpu.memory_space<vmem>>) attributes {dimension_semantics = [#tpu.dimension_semantics<parallel>, #tpu.dimension_semantics<parallel>, #tpu.dimension_semantics<arbitrary>], iteration_bounds = array<i64: 4, 1, 1>, scalar_prefetch = 0 : i64, scratch_operands = 3 : i64, tpu.core_type = #tpu.core_type<tc>, window_params = [{transform_indices = @transform_0, window_bounds = array<i64: 1, 32, 16>}, {transform_indices = @transform_1, window_bounds = array<i64: 1, 32, 16>}, {transform_indices = @transform_2, window_bounds = array<i64: 1, 32, 16>}, {transform_indices = @transform_3, window_bounds = array<i64: 1, 32, 16>}]} {
    %c0_i32 = arith.constant 0 : i32
    %0 = arith.cmpi eq, %arg2, %c0_i32 : i32
    %1 = arith.extui %0 : i1 to i32
    %c0_i32_0 = arith.constant 0 : i32
    %2 = arith.cmpi ne, %1, %c0_i32_0 : i32
    scf.if %2 {
      %cst_27 = arith.constant 0xFF800000 : f32
      %37 = vector.broadcast %cst_27 : f32 to vector<1x16xf32>
      %c0_28 = arith.constant 0 : index
      %c0_29 = arith.constant 0 : index
      %38 = vector.load %arg7[%c0_28, %c0_29] : memref<1x16xf32, #tpu.memory_space<vmem>>, vector<1x16xf32>
      tpu.vector_store %arg7[%c0_28, %c0_29], %37 {strides = array<i32>} : memref<1x16xf32, #tpu.memory_space<vmem>>, vector<1x16xf32>,
      %cst_30 = arith.constant 0.000000e+00 : f32
      %39 = vector.broadcast %cst_30 : f32 to vector<1x16xf32>
      %c0_31 = arith.constant 0 : index
      %c0_32 = arith.constant 0 : index
      %40 = vector.load %arg8[%c0_31, %c0_32] : memref<1x16xf32, #tpu.memory_space<vmem>>, vector<1x16xf32>
      tpu.vector_store %arg8[%c0_31, %c0_32], %39 {strides = array<i32>} : memref<1x16xf32, #tpu.memory_space<vmem>>, vector<1x16xf32>,
      %cst_33 = arith.constant 0.000000e+00 : f32
      %41 = vector.broadcast %cst_33 : f32 to vector<32x16xf32>
      %c0_34 = arith.constant 0 : index
      %c0_35 = arith.constant 0 : index
      %42 = vector.load %arg9[%c0_34, %c0_35] : memref<32x16xf32, #tpu.memory_space<vmem>>, vector<32x16xf32>
      tpu.vector_store %arg9[%c0_34, %c0_35], %41 {strides = array<i32>} : memref<32x16xf32, #tpu.memory_space<vmem>>, vector<32x16xf32>,
    } else {
    }
    %c0 = arith.constant 0 : index
    %c0_1 = arith.constant 0 : index
    %c0_2 = arith.constant 0 : index
    %3 = vector.load %arg3[%c0, %c0_1, %c0_2] : memref<1x32x16xf32, #tpu.memory_space<vmem>>, vector<1x32x16xf32>
    %4 = vector.shape_cast %3 : vector<1x32x16xf32> to vector<32x16xf32>
    %cst = arith.constant 0.255034864 : f32
    %5 = vector.broadcast %cst : f32 to vector<32x16xf32>
    %6 = arith.mulf %4, %5 : vector<32x16xf32>
    %c0_3 = arith.constant 0 : index
    %c0_4 = arith.constant 0 : index
    %c0_5 = arith.constant 0 : index
    %7 = vector.load %arg4[%c0_3, %c0_4, %c0_5] : memref<1x32x16xf32, #tpu.memory_space<vmem>>, vector<1x32x16xf32>
    %8 = vector.shape_cast %7 : vector<1x32x16xf32> to vector<32x16xf32>
    %c0_6 = arith.constant 0 : index
    %c0_7 = arith.constant 0 : index
    %c0_8 = arith.constant 0 : index
    %9 = vector.load %arg5[%c0_6, %c0_7, %c0_8] : memref<1x32x16xf32, #tpu.memory_space<vmem>>, vector<1x32x16xf32>
    %10 = vector.shape_cast %9 : vector<1x32x16xf32> to vector<32x16xf32>
    %cst_9 = arith.constant dense<0.000000e+00> : vector<16x16xf32>
    %11 = tpu.matmul %8, %6, %cst_9 {dimension_numbers = #tpu.dot_dimension_numbers<[0], [0], [1], [1], [0, 1, 1, 1], [], []>} : vector<32x16xf32>, vector<32x16xf32>, vector<16x16xf32> -> vector<16x16xf32>
    %c0_10 = arith.constant 0 : index
    %c0_11 = arith.constant 0 : index
    %12 = vector.load %arg7[%c0_10, %c0_11] : memref<1x16xf32, #tpu.memory_space<vmem>>, vector<1x16xf32>
    %cst_12 = arith.constant dense<0xFF800000> : vector<16xf32>
    %13 = vector.multi_reduction <maximumf>, %11, %cst_12 [0] : vector<16x16xf32> to vector<16xf32>
    %14 = vector.shape_cast %13 : vector<16xf32> to vector<1x16xf32>
    %15 = arith.maximumf %12, %14 : vector<1x16xf32>
    %16 = arith.subf %12, %15 : vector<1x16xf32>
    %17 = math.exp2 %16 : vector<1x16xf32>
    %18 = vector.broadcast %15 : vector<1x16xf32> to vector<16x16xf32>
    %19 = arith.subf %11, %18 : vector<16x16xf32>
    %20 = math.exp2 %19 : vector<16x16xf32>
    %c0_13 = arith.constant 0 : index
    %c0_14 = arith.constant 0 : index
    %21 = vector.load %arg8[%c0_13, %c0_14] : memref<1x16xf32, #tpu.memory_space<vmem>>, vector<1x16xf32>
    %22 = arith.mulf %17, %21 : vector<1x16xf32>
    %cst_15 = arith.constant dense<0.000000e+00> : vector<16xf32>
    %23 = vector.multi_reduction <add>, %20, %cst_15 [0] : vector<16x16xf32> to vector<16xf32>
    %24 = vector.shape_cast %23 : vector<16xf32> to vector<1x16xf32>
    %25 = arith.addf %22, %24 : vector<1x16xf32>
    %c0_16 = arith.constant 0 : index
    %c0_17 = arith.constant 0 : index
    %26 = vector.load %arg8[%c0_16, %c0_17] : memref<1x16xf32, #tpu.memory_space<vmem>>, vector<1x16xf32>
    tpu.vector_store %arg8[%c0_16, %c0_17], %25 {strides = array<i32>} : memref<1x16xf32, #tpu.memory_space<vmem>>, vector<1x16xf32>,
    %c0_18 = arith.constant 0 : index
    %c0_19 = arith.constant 0 : index
    %27 = vector.load %arg9[%c0_18, %c0_19] : memref<32x16xf32, #tpu.memory_space<vmem>>, vector<32x16xf32>
    %28 = vector.broadcast %17 : vector<1x16xf32> to vector<32x16xf32>
    %29 = arith.mulf %28, %27 : vector<32x16xf32>
    %cst_20 = arith.constant dense<0.000000e+00> : vector<32x16xf32>
    %30 = tpu.matmul %10, %20, %cst_20 {dimension_numbers = #tpu.dot_dimension_numbers<[1], [0], [0], [1], [0, 0, 1, 1], [], []>} : vector<32x16xf32>, vector<16x16xf32>, vector<32x16xf32> -> vector<32x16xf32>
    %31 = arith.addf %29, %30 : vector<32x16xf32>
    %c0_21 = arith.constant 0 : index
    %c0_22 = arith.constant 0 : index
    %32 = vector.load %arg9[%c0_21, %c0_22] : memref<32x16xf32, #tpu.memory_space<vmem>>, vector<32x16xf32>
    tpu.vector_store %arg9[%c0_21, %c0_22], %31 {strides = array<i32>} : memref<32x16xf32, #tpu.memory_space<vmem>>, vector<32x16xf32>,
    %c0_23 = arith.constant 0 : index
    %c0_24 = arith.constant 0 : index
    %33 = vector.load %arg7[%c0_23, %c0_24] : memref<1x16xf32, #tpu.memory_space<vmem>>, vector<1x16xf32>
    tpu.vector_store %arg7[%c0_23, %c0_24], %15 {strides = array<i32>} : memref<1x16xf32, #tpu.memory_space<vmem>>, vector<1x16xf32>,
    %c0_i32_25 = arith.constant 0 : i32
    %34 = arith.cmpi eq, %arg2, %c0_i32_25 : i32
    %35 = arith.extui %34 : i1 to i32
    %c0_i32_26 = arith.constant 0 : i32
    %36 = arith.cmpi ne, %35, %c0_i32_26 : i32
    scf.if %36 {
      %c0_27 = arith.constant 0 : index
      %c0_28 = arith.constant 0 : index
      %37 = vector.load %arg8[%c0_27, %c0_28] : memref<1x16xf32, #tpu.memory_space<vmem>>, vector<1x16xf32>
      %38 = tpu.reciprocal %37 {approx = true} : vector<1x16xf32> -> vector<1x16xf32>
      %c0_29 = arith.constant 0 : index
      %c0_30 = arith.constant 0 : index
      %39 = vector.load %arg9[%c0_29, %c0_30] : memref<32x16xf32, #tpu.memory_space<vmem>>, vector<32x16xf32>
      %40 = vector.broadcast %38 : vector<1x16xf32> to vector<32x16xf32>
      %41 = arith.mulf %39, %40 : vector<32x16xf32>
      %c0_31 = arith.constant 0 : index
      %c0_32 = arith.constant 0 : index
      %c0_33 = arith.constant 0 : index
      %42 = vector.load %arg6[%c0_31, %c0_32, %c0_33] : memref<1x32x16xf32, #tpu.memory_space<vmem>>, vector<1x32x16xf32>
      %43 = vector.shape_cast %42 : vector<1x32x16xf32> to vector<32x16xf32>
      %44 = vector.shape_cast %41 : vector<32x16xf32> to vector<1x32x16xf32>
      tpu.vector_store %arg6[%c0_31, %c0_32, %c0_33], %44 {strides = array<i32>} : memref<1x32x16xf32, #tpu.memory_space<vmem>>, vector<1x32x16xf32>,
    } else {
    }
    return
  }
  func.func @transform_0(%arg0: i32, %arg1: i32, %arg2: i32) -> (i32, i32, i32) {
    %c0_i32 = arith.constant 0 : i32
    %c0_i32_0 = arith.constant 0 : i32
    return %arg0, %c0_i32, %arg1 : i32, i32, i32
  }
  func.func @transform_1(%arg0: i32, %arg1: i32, %arg2: i32) -> (i32, i32, i32) {
    %c1_i32 = arith.constant 1 : i32
    %c0_i32 = arith.constant 0 : i32
    return %arg0, %c1_i32, %arg2 : i32, i32, i32
  }
  func.func @transform_2(%arg0: i32, %arg1: i32, %arg2: i32) -> (i32, i32, i32) {
    %c2_i32 = arith.constant 2 : i32
    %c0_i32 = arith.constant 0 : i32
    return %arg0, %c2_i32, %arg2 : i32, i32, i32
  }
  func.func @transform_3(%arg0: i32, %arg1: i32, %arg2: i32) -> (i32, i32, i32) {
    %c0_i32 = arith.constant 0 : i32
    %c0_i32_0 = arith.constant 0 : i32
    return %arg0, %c0_i32, %arg1 : i32, i32, i32
  }
}

</mosaic_0001>

<llo_original>
// kernel: qkv_attention_legacy.1
$region0: #{qkv_attention_legacy.1}
  #allocation0 [shape = 'u32[]', space=smem, size = 0x4, offset = 0x4, fixed_abs, tag = 'smem constant byte address 0x4 - core index']
  #allocation1 [shape = 'u32[144,128]{1,0:T(1,128)}', space=vmem, size = 0x12000, scoped, tag = 'internal scratch']
  #allocation2 [shape = 'f32[1,16]{1,0:T(1,128)}', space=vmem, size = 0x200, scoped, tag = 'scratch operand']
  #allocation3 [shape = 'f32[1,16]{1,0:T(1,128)}', space=vmem, size = 0x200, scoped, tag = 'scratch operand']
  #allocation4 [shape = 'f32[32,16]{1,0:T(8,128)}', space=vmem, size = 0x4000, scoped, tag = 'scratch operand']
  %s0 = inlined_call_operand.vmem [shape: f32[4,96,16], index: 0, kind: input, shape index: {}, may-alias: {0,1,2}]
  %s1 = inlined_call_operand.vmem [shape: f32[4,96,16], index: 1, kind: input, shape index: {}, may-alias: {0,1,2}]
  %s2 = inlined_call_operand.vmem [shape: f32[4,96,16], index: 2, kind: input, shape index: {}, may-alias: {0,1,2}]
  %s3 = inlined_call_operand.vmem [shape: f32[4,32,16], index: 3, kind: output, shape index: {}]
  %s4 = sld [smem:[#allocation0]]
  $region53: #{qkv_attention_legacy.1} parent=0
    _
  %s6 = ssub.s32 1, %s4
  %s7 = scalar_select 0, %s6, %s4
  loop: start=0, step=1, limit=6
  $region2: #{qkv_attention_legacy.1} parent=0 // loop_pre_header
    _
  $region3: #{qkv_attention_legacy.1} parent=0 // loop_header
    %s9 = sphi 0, %s13
    %p10 = scmp.ge.s32.totalorder %s9, 6
    %s16 = sphi 0, %s35
    %s17 = sphi 0, %s31
    %s18 = sphi 0, %s27
    %s19 = sphi 0, %s16
    %s20 = sphi 0, %s17
    %s21 = sphi 0, %s18
    %s22 = sphi 0, %s19
    %s23 = sphi 0, %s20
    %s24 = sphi 0, %s21
    %s40 = sphi 0, %s42
    %s43 = sphi 0, %s40
    %s44 = sphi 0, %s43
    %s60 = sphi 0, %s44
    %s68 = sphi 0, %s70
    %s71 = sphi 0, %s68
    %s72 = sphi 0, %s71
    %s88 = sphi 0, %s72
    %s96 = sphi 0, %s98
    %s99 = sphi 0, %s96
    %s100 = sphi 0, %s99
    %s116 = sphi 0, %s100
    %s124 = sphi 0, %s126
    %s127 = sphi 0, %s124
    %s128 = sphi 0, %s127
    %s144 = sphi 0, %s128
  $region4: #{qkv_attention_legacy.1} parent=0 // loop_header_branch
    %12 = sbr.rel (%p10) target = $region8
  $region5: #{qkv_attention_legacy.1} parent=0 // loop_body
    %s14 = ssub.s32 %s9, 1
    %s15 = ssub.s32 %s9, 2
    %s25 = sadd.s32 1, %s18
    %p26 = scmp.ge.s32.totalorder %s25, 1
    %s27 = scalar_select %p26, 0, %s25
    %s28 = sadd.s32 1, %s17
    %s29 = scalar_select %p26, %s28, %s17
    %p30 = scmp.ge.s32.totalorder %s29, 1
    %s31 = scalar_select %p30, 0, %s29
    %s32 = sadd.s32 1, %s16
    %s33 = scalar_select %p30, %s32, %s16
    %p34 = scmp.ge.s32.totalorder %s33, 4
    %s35 = scalar_select %p34, 0, %s33
    %s36 = ssub.s32 %s16, %s35
    %s37 = ssub.s32 %s17, %s31
    %s38 = sor.u32 %s36, %s37
    %p39 = scmp.eq.s32.totalorder %s38, 0
    %s41 = sadd.s32 %s40, 1
    %s42 = scalar_select %p39, %s40, %s41
    %p45 = pneg %p39
    %p46 = scmp.eq.s32.totalorder %s9, 3
    %p47 = por %p45, %p46
    %p48 = scmp.ne.s32.totalorder %s40, %s43
    %p49 = scmp.eq.s32.totalorder %s9, 0
    %p50 = por %p48, %p49
    %p51 = scmp.ne.s32.totalorder %s40, %s43
    %p52 = scmp.eq.s32.totalorder %s14, 3
    %p53 = por %p51, %p52
    %p54 = scmp.ne.s32.totalorder %s43, %s44
    %p55 = scmp.eq.s32.totalorder %s14, 0
    %p56 = por %p54, %p55
    %p57 = scmp.ne.s32.totalorder %s43, %s44
    %p58 = scmp.eq.s32.totalorder %s15, 3
    %p59 = por %p57, %p58
    %p61 = scmp.ne.s32.totalorder %s44, %s60
    %p62 = scmp.eq.s32.totalorder %s15, 0
    %p63 = por %p61, %p62
    %s64 = ssub.s32 %s16, %s35
    %s65 = ssub.s32 %s18, %s27
    %s66 = sor.u32 %s64, %s65
    %p67 = scmp.eq.s32.totalorder %s66, 0
    %s69 = sadd.s32 %s68, 1
    %s70 = scalar_select %p67, %s68, %s69
    %p73 = pneg %p67
    %p74 = scmp.eq.s32.totalorder %s9, 3
    %p75 = por %p73, %p74
    %p76 = scmp.ne.s32.totalorder %s68, %s71
    %p77 = scmp.eq.s32.totalorder %s9, 0
    %p78 = por %p76, %p77
    %p79 = scmp.ne.s32.totalorder %s68, %s71
    %p80 = scmp.eq.s32.totalorder %s14, 3
    %p81 = por %p79, %p80
    %p82 = scmp.ne.s32.totalorder %s71, %s72
    %p83 = scmp.eq.s32.totalorder %s14, 0
    %p84 = por %p82, %p83
    %p85 = scmp.ne.s32.totalorder %s71, %s72
    %p86 = scmp.eq.s32.totalorder %s15, 3
    %p87 = por %p85, %p86
    %p89 = scmp.ne.s32.totalorder %s72, %s88
    %p90 = scmp.eq.s32.totalorder %s15, 0
    %p91 = por %p89, %p90
    %s92 = ssub.s32 %s16, %s35
    %s93 = ssub.s32 %s18, %s27
    %s94 = sor.u32 %s92, %s93
    %p95 = scmp.eq.s32.totalorder %s94, 0
    %s97 = sadd.s32 %s96, 1
    %s98 = scalar_select %p95, %s96, %s97
    %p101 = pneg %p95
    %p102 = scmp.eq.s32.totalorder %s9, 3
    %p103 = por %p101, %p102
    %p104 = scmp.ne.s32.totalorder %s96, %s99
    %p105 = scmp.eq.s32.totalorder %s9, 0
    %p106 = por %p104, %p105
    %p107 = scmp.ne.s32.totalorder %s96, %s99
    %p108 = scmp.eq.s32.totalorder %s14, 3
    %p109 = por %p107, %p108
    %p110 = scmp.ne.s32.totalorder %s99, %s100
    %p111 = scmp.eq.s32.totalorder %s14, 0
    %p112 = por %p110, %p111
    %p113 = scmp.ne.s32.totalorder %s99, %s100
    %p114 = scmp.eq.s32.totalorder %s15, 3
    %p115 = por %p113, %p114
    %p117 = scmp.ne.s32.totalorder %s100, %s116
    %p118 = scmp.eq.s32.totalorder %s15, 0
    %p119 = por %p117, %p118
    %s120 = ssub.s32 %s16, %s35
    %s121 = ssub.s32 %s17, %s31
    %s122 = sor.u32 %s120, %s121
    %p123 = scmp.eq.s32.totalorder %s122, 0
    %s125 = sadd.s32 %s124, 1
    %s126 = scalar_select %p123, %s124, %s125
    %p129 = pneg %p123
    %p130 = scmp.eq.s32.totalorder %s9, 3
    %p131 = por %p129, %p130
    %p132 = scmp.ne.s32.totalorder %s124, %s127
    %p133 = scmp.eq.s32.totalorder %s9, 0
    %p134 = por %p132, %p133
    %p135 = scmp.ne.s32.totalorder %s124, %s127
    %p136 = scmp.eq.s32.totalorder %s14, 3
    %p137 = por %p135, %p136
    %p138 = scmp.ne.s32.totalorder %s127, %s128
    %p139 = scmp.eq.s32.totalorder %s14, 0
    %p140 = por %p138, %p139
    %p141 = scmp.ne.s32.totalorder %s127, %s128
    %p142 = scmp.eq.s32.totalorder %s15, 3
    %p143 = por %p141, %p142
    %p145 = scmp.ne.s32.totalorder %s128, %s144
    %p146 = scmp.eq.s32.totalorder %s15, 0
    %p147 = por %p145, %p146
    %p148 = scmp.le.s32.totalorder 1, %s9
    %p149 = scmp.lt.s32.totalorder %s9, 5
    %p150 = pnand %p148, %p149
    %p151 = pneg %p150
    // Predicated region
    $region9: #{qkv_attention_legacy.1} parent=5 // pred_check
      _
    $region10: #{qkv_attention_legacy.1} parent=5 // pred_check_branch
      %153 = sbr.rel (%p150) target = $region12
    $region11: #{qkv_attention_legacy.1} parent=5 // pred_region
      %s154 = ssub.s32 %s9, 1
    $region12: #{qkv_attention_legacy.1} parent=5 // pred_fallthru
      _
    %p155 = scmp.lt.s32.totalorder %s9, 4
    // Predicated region
    $region13: #{qkv_attention_legacy.1} parent=5 // pred_check
      %p156 = pneg %p155
    $region14: #{qkv_attention_legacy.1} parent=5 // pred_check_branch
      %158 = sbr.rel (%p156) target = $region16
    $region15: #{qkv_attention_legacy.1} parent=5 // pred_region
      // Predicated region
      $region17: #{qkv_attention_legacy.1} parent=15 // pred_check
        %p159 = pneg %p50
      $region18: #{qkv_attention_legacy.1} parent=15 // pred_check_branch
        %161 = sbr.rel (%p159) target = $region20
      $region19: #{qkv_attention_legacy.1} parent=15 // pred_region
        %p162 = scmp.lt.s32.totalorder %s16, 3
        %s163 = scalar_select %p162, %s16, 3
        %p164 = scmp.lt.s32.totalorder %s17, 0
        %s165 = scalar_select %p164, %s17, 0
        %s166 = smul.addr %s163, 12
        %s167 = sadd.s32 %s165, %s166
        %s168 = smul.addr %s167, 8
        %s169 = scalar_lea.vmem %s0, %s168
      $region20: #{qkv_attention_legacy.1} parent=15 // pred_fallthru
        _
      // Predicated region
      $region21: #{qkv_attention_legacy.1} parent=15 // pred_check
        %p170 = pneg %p78
      $region22: #{qkv_attention_legacy.1} parent=15 // pred_check_branch
        %172 = sbr.rel (%p170) target = $region24
      $region23: #{qkv_attention_legacy.1} parent=15 // pred_region
        %p173 = scmp.lt.s32.totalorder %s16, 3
        %s174 = scalar_select %p173, %s16, 3
        %p175 = scmp.lt.s32.totalorder %s18, 0
        %s176 = scalar_select %p175, %s18, 0
        %s177 = sadd.s32 %s176, 4
        %s178 = smul.addr %s174, 12
        %s179 = sadd.s32 %s177, %s178
        %s180 = smul.addr %s179, 8
        %s181 = scalar_lea.vmem %s1, %s180
      $region24: #{qkv_attention_legacy.1} parent=15 // pred_fallthru
        _
      // Predicated region
      $region25: #{qkv_attention_legacy.1} parent=15 // pred_check
        %p182 = pneg %p106
      $region26: #{qkv_attention_legacy.1} parent=15 // pred_check_branch
        %184 = sbr.rel (%p182) target = $region28
      $region27: #{qkv_attention_legacy.1} parent=15 // pred_region
        %p185 = scmp.lt.s32.totalorder %s16, 3
        %s186 = scalar_select %p185, %s16, 3
        %p187 = scmp.lt.s32.totalorder %s18, 0
        %s188 = scalar_select %p187, %s18, 0
        %s189 = sadd.s32 %s188, 8
        %s190 = smul.addr %s186, 12
        %s191 = sadd.s32 %s189, %s190
        %s192 = smul.addr %s191, 8
        %s193 = scalar_lea.vmem %s2, %s192
      $region28: #{qkv_attention_legacy.1} parent=15 // pred_fallthru
        _
    $region16: #{qkv_attention_legacy.1} parent=5 // pred_fallthru
      _
    %p194 = scmp.le.s32.totalorder 1, %s9
    %p195 = scmp.lt.s32.totalorder %s9, 5
    %p196 = pnand %p194, %p195
    %p197 = pneg %p196
    // Predicated region
    $region29: #{qkv_attention_legacy.1} parent=5 // pred_check
      _
    $region30: #{qkv_attention_legacy.1} parent=5 // pred_check_branch
      %199 = sbr.rel (%p196) target = $region32
    $region31: #{qkv_attention_legacy.1} parent=5 // pred_region
      %s200 = ssub.s32 %s9, 1
      %p201 = scmp.lt.s32.totalorder %s19, 3
      %s202 = scalar_select %p201, %s19, 3
      %p203 = scmp.lt.s32.totalorder %s20, 0
      %s204 = scalar_select %p203, %s20, 0
      %s205 = smul.addr %s202, 12
      %s206 = sadd.s32 %s204, %s205
      %s207 = smul.addr %s206, 8
      %s208 = scalar_lea.vmem %s0, %s207
      %p209 = pneg %p56
      %p210 = pneg %p53
      %p211 = scmp.lt.s32.totalorder %s19, 3
      %s212 = scalar_select %p211, %s19, 3
      %p213 = scmp.lt.s32.totalorder %s21, 0
      %s214 = scalar_select %p213, %s21, 0
      %s215 = sadd.s32 %s214, 4
      %s216 = smul.addr %s212, 12
      %s217 = sadd.s32 %s215, %s216
      %s218 = smul.addr %s217, 8
      %s219 = scalar_lea.vmem %s1, %s218
      %p220 = pneg %p84
      %p221 = pneg %p81
      %p222 = scmp.lt.s32.totalorder %s19, 3
      %s223 = scalar_select %p222, %s19, 3
      %p224 = scmp.lt.s32.totalorder %s21, 0
      %s225 = scalar_select %p224, %s21, 0
      %s226 = sadd.s32 %s225, 8
      %s227 = smul.addr %s223, 12
      %s228 = sadd.s32 %s226, %s227
      %s229 = smul.addr %s228, 8
      %s230 = scalar_lea.vmem %s2, %s229
      %p231 = pneg %p112
      %p232 = pneg %p109
      %p233 = pneg %p140
      %p234 = pneg %p137
      %p235 = scmp.lt.s32.totalorder %s19, 3
      %s236 = scalar_select %p235, %s19, 3
      %p237 = scmp.lt.s32.totalorder %s20, 0
      %s238 = scalar_select %p237, %s20, 0
      %s239 = smul.addr %s236, 4
      %s240 = sadd.s32 %s238, %s239
      %s241 = smul.addr %s240, 8
      %s242 = scalar_lea.vmem %s3, %s241
      %p243 = scmp.lt.s32.totalorder %s19, 3
      %s244 = scalar_select %p243, %s19, 3
      %p245 = scmp.lt.s32.totalorder %s20, 0
      %s246 = scalar_select %p245, %s20, 0
      %s247 = smul.addr %s244, 12
      %s248 = sadd.s32 %s246, %s247
      %s249 = smul.addr %s248, 8
      %s250 = scalar_lea.vmem %s0, %s249
      %p251 = scmp.lt.s32.totalorder %s19, 3
      %s252 = scalar_select %p251, %s19, 3
      %p253 = scmp.lt.s32.totalorder %s21, 0
      %s254 = scalar_select %p253, %s21, 0
      %s255 = sadd.s32 %s254, 4
      %s256 = smul.addr %s252, 12
      %s257 = sadd.s32 %s255, %s256
      %s258 = smul.addr %s257, 8
      %s259 = scalar_lea.vmem %s1, %s258
      %p260 = scmp.lt.s32.totalorder %s19, 3
      %s261 = scalar_select %p260, %s19, 3
      %p262 = scmp.lt.s32.totalorder %s21, 0
      %s263 = scalar_select %p262, %s21, 0
      %s264 = sadd.s32 %s263, 8
      %s265 = smul.addr %s261, 12
      %s266 = sadd.s32 %s264, %s265
      %s267 = smul.addr %s266, 8
      %s268 = scalar_lea.vmem %s2, %s267
      %p269 = scmp.lt.s32.totalorder %s19, 3
      %s270 = scalar_select %p269, %s19, 3
      %p271 = scmp.lt.s32.totalorder %s20, 0
      %s272 = scalar_select %p271, %s20, 0
      %s273 = smul.addr %s270, 4
      %s274 = sadd.s32 %s272, %s273
      %s275 = smul.addr %s274, 8
      %s276 = scalar_lea.vmem %s3, %s275
      %p277 = scmp.eq.s32.totalorder %s21, 0
      // Predicated region
      $region33: #{qkv_attention_legacy.1} parent=31 // pred_check
        %p278 = pneg %p277
      $region34: #{qkv_attention_legacy.1} parent=31 // pred_check_branch
        %280 = sbr.rel (%p278) target = $region36
      $region35: #{qkv_attention_legacy.1} parent=31 // pred_region
        %vm281 = vcmask 122880
        %282 = vst.msk [vmem:[#allocation2] sm:$0x1] %vm281, -inf
        %283 = vst.msk [vmem:[#allocation3] sm:$0x1] %vm281, 0.0
        %vm284 = vcmask 130048
        %285 = vst.msk [vmem:[#allocation4] sm:$0xff] %vm284, 0.0
        %286 = vst.msk [vmem:[#allocation4 + $0x8] sm:$0xff] %vm284, 0.0
        %287 = vst.msk [vmem:[#allocation4 + $0x10] sm:$0xff] %vm284, 0.0
        %288 = vst.msk [vmem:[#allocation4 + $0x18] sm:$0xff] %vm284, 0.0
      $region36: #{qkv_attention_legacy.1} parent=31 // pred_fallthru
        _
      %v289 = vld [vmem:[%s250] sm:$0xff]
      %v290 = vld [vmem:[%s250 + $0x8] sm:$0xff]
      %v291 = vld [vmem:[%s250 + $0x10] sm:$0xff]
      %v292 = vld [vmem:[%s250 + $0x18] sm:$0xff]
      %v293 = vmul.f32 %v289, 0.25503486
      %v294 = vmul.f32 %v290, 0.25503486
      %v295 = vmul.f32 %v291, 0.25503486
      %v296 = vmul.f32 %v292, 0.25503486
      %v297 = vld [vmem:[%s259] sm:$0xff]
      %v298 = vld [vmem:[%s259 + $0x8] sm:$0xff]
      %v299 = vld [vmem:[%s259 + $0x10] sm:$0xff]
      %v300 = vld [vmem:[%s259 + $0x18] sm:$0xff]
      %v301 = vld [vmem:[%s268] sm:$0xff]
      %v302 = vld [vmem:[%s268 + $0x8] sm:$0xff]
      %v303 = vld [vmem:[%s268 + $0x10] sm:$0xff]
      %v304 = vld [vmem:[%s268 + $0x18] sm:$0xff]
      %305 = vxpose.xlu0.b32.start [1/16] %v297, 128
      %306 = vxpose.xlu0.b32.cont [2/16] %v298, 128
      %307 = vxpose.xlu0.b32.cont [3/16] %v299, 128
      %308 = vxpose.xlu0.b32.cont [4/16] %v300, 128
      %309 = vxpose.xlu0.b32.cont [5/16] 0.0, 128
      %310 = vxpose.xlu0.b32.cont [6/16] 0.0, 128
      %311 = vxpose.xlu0.b32.cont [7/16] 0.0, 128
      %312 = vxpose.xlu0.b32.cont [8/16] 0.0, 128
      %313 = vxpose.xlu0.b32.cont [9/16] 0.0, 128
      %314 = vxpose.xlu0.b32.cont [10/16] 0.0, 128
      %315 = vxpose.xlu0.b32.cont [11/16] 0.0, 128
      %316 = vxpose.xlu0.b32.cont [12/16] 0.0, 128
      %317 = vxpose.xlu0.b32.cont [13/16] 0.0, 128
      %318 = vxpose.xlu0.b32.cont [14/16] 0.0, 128
      %319 = vxpose.xlu0.b32.cont [15/16] 0.0, 128
      %320 = vxpose.xlu0.b32.end [16/16] 0.0, 128
      %v321 = vpop.trf.xlu0
      %v322 = vpop.trf.xlu0
      %v323 = vpop.trf.xlu0
      %v324 = vpop.trf.xlu0
      %v325 = vpop.trf.xlu0
      %v326 = vpop.trf.xlu0
      %v327 = vpop.trf.xlu0
      %v328 = vpop.trf.xlu0
      %v329 = vpop.trf.xlu0
      %v330 = vpop.trf.xlu0
      %v331 = vpop.trf.xlu0
      %v332 = vpop.trf.xlu0
      %v333 = vpop.trf.xlu0
      %v334 = vpop.trf.xlu0
      %v335 = vpop.trf.xlu0
      %v336 = vpop.trf.xlu0
      %vm337 = vcmask 261120
      %v339 = vsel %vm337, %v321, 0
      %v342 = vsel %vm337, %v322, 0
      %344 = vmatprep.subr.mxu0 0.0
      %345 = vmatpush1.msra.mxu0 %v293
      %346 = vmatprep.subr.mxu0 0.0
      %347 = vmatpush1.msra.mxu0 %v294
      %348 = vmatprep.subr.mxu0 0.0
      %349 = vmatpush1.msra.mxu0 %v295
      %350 = vmatprep.subr.mxu0 0.0
      %351 = vmatpush1.msra.mxu0 %v296
      %352 = vmatprep.subr.mxu0 0.0
      %353 = vmatpush1.msra.mxu0 0.0
      %354 = vmatprep.subr.mxu0 0.0
      %355 = vmatpush1.msra.mxu0 0.0
      %356 = vmatprep.subr.mxu0 0.0
      %357 = vmatpush1.msra.mxu0 0.0
      %358 = vmatprep.subr.mxu0 0.0
      %359 = vmatpush1.msra.mxu0 0.0
      %360 = vmatprep.subr.mxu0 0.0
      %361 = vmatpush1.msra.mxu0 0.0
      %362 = vmatprep.subr.mxu0 0.0
      %363 = vmatpush1.msra.mxu0 0.0
      %364 = vmatprep.subr.mxu0 0.0
      %365 = vmatpush1.msra.mxu0 0.0
      %366 = vmatprep.subr.mxu0 0.0
      %367 = vmatpush1.msra.mxu0 0.0
      %368 = vmatprep.subr.mxu0 0.0
      %369 = vmatpush1.msra.mxu0 0.0
      %370 = vmatprep.subr.mxu0 0.0
      %371 = vmatpush1.msra.mxu0 0.0
      %372 = vmatprep.subr.mxu0 0.0
      %373 = vmatpush1.msra.mxu0 0.0
      %374 = vmatprep.subr.mxu0 0.0
      %375 = vmatpush1.msra.mxu0 0.0
      %376 = vmatprep.subr.mxu0 0.0
      %377 = vmatpush1.msra.mxu0 0.0
      %378 = vmatprep.subr.mxu0 0.0
      %379 = vmatpush1.msra.mxu0 0.0
      %380 = vmatprep.subr.mxu0 0.0
      %381 = vmatpush1.msra.mxu0 0.0
      %382 = vmatprep.subr.mxu0 0.0
      %383 = vmatpush1.msra.mxu0 0.0
      %384 = vmatprep.subr.mxu0 0.0
      %385 = vmatpush1.msra.mxu0 0.0
      %386 = vmatprep.subr.mxu0 0.0
      %387 = vmatpush1.msra.mxu0 0.0
      %388 = vmatprep.subr.mxu0 0.0
      %389 = vmatpush1.msra.mxu0 0.0
      %390 = vmatprep.subr.mxu0 0.0
      %391 = vmatpush1.msra.mxu0 0.0
      %392 = vmatprep.subr.mxu0 0.0
      %393 = vmatpush1.msra.mxu0 0.0
      %394 = vmatprep.subr.mxu0 0.0
      %395 = vmatpush1.msra.mxu0 0.0
      %396 = vmatprep.subr.mxu0 0.0
      %397 = vmatpush1.msra.mxu0 0.0
      %398 = vmatprep.subr.mxu0 0.0
      %399 = vmatpush1.msra.mxu0 0.0
      %400 = vmatprep.subr.mxu0 0.0
      %401 = vmatpush1.msra.mxu0 0.0
      %402 = vmatprep.subr.mxu0 0.0
      %403 = vmatpush1.msra.mxu0 0.0
      %404 = vmatprep.subr.mxu0 0.0
      %405 = vmatpush1.msra.mxu0 0.0
      %406 = vmatprep.subr.mxu0 0.0
      %407 = vmatpush1.msra.mxu0 0.0
      %408 = vmatprep.mubr.f32.mxu0 0.0
      %409 = vmatmul.mubr.f32.gmra.mrb[0].mxu0 %v339
      %v410 = vpop.f32.mrb[0].mxu0
      %v411 = vadd.f32 0.0, %v410
      %v412 = vpop.f32.mrb[0].mxu0
      %413 = vmatprep.mubr.f32.mxu0 0.0
      %414 = vmatmul.mubr.f32.gmra.mrb[0].mxu0 %v342
      %v415 = vpop.f32.mrb[0].mxu0
      %v416 = vadd.f32 0.0, %v415
      %v417 = vpop.f32.mrb[0].mxu0
      %418 = vdwg.mxu0
      %v419 = vld [vmem:[#allocation2] sm:$0x1]
      %vm420 = vcmask 130048
      %v421 = vsel %vm420, %v411, -inf
      %v422 = vsel %vm420, %v416, -inf
      %v423 = vmax.f32 %v421, %v422
      %v424 = vrot.slane %v423, 4
      %v425 = vmax.f32 %v423, %v424
      %v426 = vrot.slane %v425, 2
      %v427 = vmax.f32 %v425, %v426
      %v428 = vrot.slane %v427, 1
      %v429 = vmax.f32 %v427, %v428
      %v430 = vmax.f32 %v419, %v429
      %v431 = vsub.f32 %v419, %v430
      %v432 = vpow.pop %v431
      %v434 = vlaneseq
      %v435 = vshrl.u32 %v434, 7
      %v436 = vsub.s32 0, %v435
      %v437 = vrot.slane %v430, %v436
      %v439 = vsub.f32 %v411, %v437
      %v440 = vsub.f32 %v416, %v437
      %v441 = vpow.pop %v439
      %v442 = vpow.pop %v440
      %v443 = vld [vmem:[#allocation3] sm:$0x1]
      %v444 = vmul.f32 %v432, %v443
      %v445 = vsel %vm420, %v441, 0.0
      %v446 = vsel %vm420, %v442, 0.0
      %v447 = vadd.f32 %v445, %v446
      %v448 = vrot.slane %v447, 4
      %v449 = vadd.f32 %v447, %v448
      %v450 = vrot.slane %v449, 2
      %v451 = vadd.f32 %v449, %v450
      %v452 = vrot.slane %v451, 1
      %v453 = vadd.f32 %v451, %v452
      %v454 = vadd.f32 %v444, %v453
      %vm455 = vcmask 122880
      %456 = vst.msk [vmem:[#allocation3] sm:$0x1] %vm455, %v454
      %v457 = vld [vmem:[#allocation4] sm:$0xff]
      %v458 = vld [vmem:[#allocation4 + $0x8] sm:$0xff]
      %v459 = vld [vmem:[#allocation4 + $0x10] sm:$0xff]
      %v460 = vld [vmem:[#allocation4 + $0x18] sm:$0xff]
      %v462 = vlaneseq
      %v463 = vshrl.u32 %v462, 7
      %v464 = vsub.s32 0, %v463
      %v465 = vrot.slane %v432, %v464
      %v467 = vmul.f32 %v465, %v457
      %v468 = vmul.f32 %v465, %v458
      %v469 = vmul.f32 %v465, %v459
      %v470 = vmul.f32 %v465, %v460
      %v472 = vsel %vm420, %v301, 0
      %v475 = vsel %vm420, %v302, 0
      %v478 = vsel %vm420, %v303, 0
      %v481 = vsel %vm420, %v304, 0
      %483 = vmatprep.subr.mxu0 0.0
      %484 = vmatpush1.msra.mxu0 %v441
      %485 = vmatprep.subr.mxu0 0.0
      %486 = vmatpush1.msra.mxu0 %v442
      %487 = vmatprep.subr.mxu0 0.0
      %488 = vmatpush1.msra.mxu0 0.0
      %489 = vmatprep.subr.mxu0 0.0
      %490 = vmatpush1.msra.mxu0 0.0
      %491 = vmatprep.subr.mxu0 0.0
      %492 = vmatpush1.msra.mxu0 0.0
      %493 = vmatprep.subr.mxu0 0.0
      %494 = vmatpush1.msra.mxu0 0.0
      %495 = vmatprep.subr.mxu0 0.0
      %496 = vmatpush1.msra.mxu0 0.0
      %497 = vmatprep.subr.mxu0 0.0
      %498 = vmatpush1.msra.mxu0 0.0
      %499 = vmatprep.subr.mxu0 0.0
      %500 = vmatpush1.msra.mxu0 0.0
      %501 = vmatprep.subr.mxu0 0.0
      %502 = vmatpush1.msra.mxu0 0.0
      %503 = vmatprep.subr.mxu0 0.0
      %504 = vmatpush1.msra.mxu0 0.0
      %505 = vmatprep.subr.mxu0 0.0
      %506 = vmatpush1.msra.mxu0 0.0
      %507 = vmatprep.subr.mxu0 0.0
      %508 = vmatpush1.msra.mxu0 0.0
      %509 = vmatprep.subr.mxu0 0.0
      %510 = vmatpush1.msra.mxu0 0.0
      %511 = vmatprep.subr.mxu0 0.0
      %512 = vmatpush1.msra.mxu0 0.0
      %513 = vmatprep.subr.mxu0 0.0
      %514 = vmatpush1.msra.mxu0 0.0
      %515 = vmatprep.subr.mxu0 0.0
      %516 = vmatpush1.msra.mxu0 0.0
      %517 = vmatprep.subr.mxu0 0.0
      %518 = vmatpush1.msra.mxu0 0.0
      %519 = vmatprep.subr.mxu0 0.0
      %520 = vmatpush1.msra.mxu0 0.0
      %521 = vmatprep.subr.mxu0 0.0
      %522 = vmatpush1.msra.mxu0 0.0
      %523 = vmatprep.subr.mxu0 0.0
      %524 = vmatpush1.msra.mxu0 0.0
      %525 = vmatprep.subr.mxu0 0.0
      %526 = vmatpush1.msra.mxu0 0.0
      %527 = vmatprep.subr.mxu0 0.0
      %528 = vmatpush1.msra.mxu0 0.0
      %529 = vmatprep.subr.mxu0 0.0
      %530 = vmatpush1.msra.mxu0 0.0
      %531 = vmatprep.subr.mxu0 0.0
      %532 = vmatpush1.msra.mxu0 0.0
      %533 = vmatprep.subr.mxu0 0.0
      %534 = vmatpush1.msra.mxu0 0.0
      %535 = vmatprep.subr.mxu0 0.0
      %536 = vmatpush1.msra.mxu0 0.0
      %537 = vmatprep.subr.mxu0 0.0
      %538 = vmatpush1.msra.mxu0 0.0
      %539 = vmatprep.subr.mxu0 0.0
      %540 = vmatpush1.msra.mxu0 0.0
      %541 = vmatprep.subr.mxu0 0.0
      %542 = vmatpush1.msra.mxu0 0.0
      %543 = vmatprep.subr.mxu0 0.0
      %544 = vmatpush1.msra.mxu0 0.0
      %545 = vmatprep.subr.mxu0 0.0
      %546 = vmatpush1.msra.mxu0 0.0
      %547 = vmatprep.mubr.f32.mxu0 0.0
      %548 = vmatmul.mubr.f32.gmra.mrb[0].mxu0 %v472
      %v549 = vpop.f32.mrb[0].mxu0
      %v550 = vadd.f32 0.0, %v549
      %v551 = vpop.f32.mrb[0].mxu0
      %552 = vmatprep.mubr.f32.mxu0 0.0
      %553 = vmatmul.mubr.f32.gmra.mrb[0].mxu0 %v475
      %v554 = vpop.f32.mrb[0].mxu0
      %v555 = vadd.f32 0.0, %v554
      %v556 = vpop.f32.mrb[0].mxu0
      %557 = vmatprep.mubr.f32.mxu0 0.0
      %558 = vmatmul.mubr.f32.gmra.mrb[0].mxu0 %v478
      %v559 = vpop.f32.mrb[0].mxu0
      %v560 = vadd.f32 0.0, %v559
      %v561 = vpop.f32.mrb[0].mxu0
      %562 = vmatprep.mubr.f32.mxu0 0.0
      %563 = vmatmul.mubr.f32.gmra.mrb[0].mxu0 %v481
      %v564 = vpop.f32.mrb[0].mxu0
      %v565 = vadd.f32 0.0, %v564
      %v566 = vpop.f32.mrb[0].mxu0
      %567 = vdwg.mxu0
      %v568 = vadd.f32 %v467, %v550
      %v569 = vadd.f32 %v468, %v555
      %v570 = vadd.f32 %v469, %v560
      %v571 = vadd.f32 %v470, %v565
      %572 = vst.msk [vmem:[#allocation4] sm:$0xff] %vm420, %v568
      %573 = vst.msk [vmem:[#allocation4 + $0x8] sm:$0xff] %vm420, %v569
      %574 = vst.msk [vmem:[#allocation4 + $0x10] sm:$0xff] %vm420, %v570
      %575 = vst.msk [vmem:[#allocation4 + $0x18] sm:$0xff] %vm420, %v571
      %576 = vst.msk [vmem:[#allocation2] sm:$0x1] %vm455, %v430
      // Predicated region
      $region37: #{qkv_attention_legacy.1} parent=31 // pred_check
        %p577 = pneg %p277
      $region38: #{qkv_attention_legacy.1} parent=31 // pred_check_branch
        %579 = sbr.rel (%p577) target = $region40
      $region39: #{qkv_attention_legacy.1} parent=31 // pred_region
        %v580 = vld [vmem:[#allocation3] sm:$0x1]
        %v581 = vrcp.pop %v580
        %v582 = vld [vmem:[#allocation4] sm:$0xff]
        %v583 = vld [vmem:[#allocation4 + $0x8] sm:$0xff]
        %v584 = vld [vmem:[#allocation4 + $0x10] sm:$0xff]
        %v585 = vld [vmem:[#allocation4 + $0x18] sm:$0xff]
        %v587 = vlaneseq
        %v588 = vshrl.u32 %v587, 7
        %v589 = vsub.s32 0, %v588
        %v590 = vrot.slane %v581, %v589
        %v592 = vmul.f32 %v582, %v590
        %v593 = vmul.f32 %v583, %v590
        %v594 = vmul.f32 %v584, %v590
        %v595 = vmul.f32 %v585, %v590
        %596 = vst.msk [vmem:[%s276] sm:$0xff] %vm420, %v592
        %597 = vst.msk [vmem:[%s276 + $0x8] sm:$0xff] %vm420, %v593
        %598 = vst.msk [vmem:[%s276 + $0x10] sm:$0xff] %vm420, %v594
        %599 = vst.msk [vmem:[%s276 + $0x18] sm:$0xff] %vm420, %v595
      $region40: #{qkv_attention_legacy.1} parent=31 // pred_fallthru
        _
      %p600 = scmp.lt.s32.totalorder %s19, 3
      %s601 = scalar_select %p600, %s19, 3
      %p602 = scmp.lt.s32.totalorder %s20, 0
      %s603 = scalar_select %p602, %s20, 0
      %s604 = smul.addr %s601, 4
      %s605 = sadd.s32 %s603, %s604
      %s606 = smul.addr %s605, 8
      %s607 = scalar_lea.vmem %s3, %s606
      // Predicated region
      $region41: #{qkv_attention_legacy.1} parent=31 // pred_check
        %p608 = pneg %p137
      $region42: #{qkv_attention_legacy.1} parent=31 // pred_check_branch
        %610 = sbr.rel (%p608) target = $region44
      $region43: #{qkv_attention_legacy.1} parent=31 // pred_region
        _
      $region44: #{qkv_attention_legacy.1} parent=31 // pred_fallthru
        _
    $region32: #{qkv_attention_legacy.1} parent=5 // pred_fallthru
      _
    %p611 = scmp.le.s32.totalorder 2, %s9
    // Predicated region
    $region45: #{qkv_attention_legacy.1} parent=5 // pred_check
      %p612 = pneg %p611
    $region46: #{qkv_attention_legacy.1} parent=5 // pred_check_branch
      %614 = sbr.rel (%p612) target = $region48
    $region47: #{qkv_attention_legacy.1} parent=5 // pred_region
      %s615 = ssub.s32 %s9, 2
      // Predicated region
      $region49: #{qkv_attention_legacy.1} parent=47 // pred_check
        %p616 = pneg %p143
      $region50: #{qkv_attention_legacy.1} parent=47 // pred_check_branch
        %618 = sbr.rel (%p616) target = $region52
      $region51: #{qkv_attention_legacy.1} parent=47 // pred_region
        %p619 = scmp.lt.s32.totalorder %s22, 3
        %s620 = scalar_select %p619, %s22, 3
        %p621 = scmp.lt.s32.totalorder %s23, 0
        %s622 = scalar_select %p621, %s23, 0
        %s623 = smul.addr %s620, 4
        %s624 = sadd.s32 %s622, %s623
        %s625 = smul.addr %s624, 8
        %s626 = scalar_lea.vmem %s3, %s625
      $region52: #{qkv_attention_legacy.1} parent=47 // pred_fallthru
        _
    $region48: #{qkv_attention_legacy.1} parent=5 // pred_fallthru
      _
  $region6: #{qkv_attention_legacy.1} parent=0 // loop_footer
    %s13 = sadd.s32 1, %s9
  $region7: #{qkv_attention_legacy.1} parent=0 // loop_footer_branch
    %8 = sbr.rel target = $region3
  $region8: #{qkv_attention_legacy.1} parent=0 // loop_exit
    _

</llo_original>
